<compile_context>
chip_gen: v7x
topology: tpu7x:2x2x1
jax: 0.10.0
libtpu: 0.0.40
codegen_flags: <defaults>
</compile_context>

<pallas_src>
import functools

import jax
import jax.numpy as jnp
from jax.experimental import pallas as pl
from jax.experimental.pallas import tpu as pltpu


def _msa_kernel(x_ref, w_ref, b_ref, o_ref, *, batch, n_tokens, n_heads, d_head,
                compute_dtype):
    # x_ref: (B*N, d)      flattened tokens (row = b*N + n)
    # w_ref: (d, 3*d)      block-diagonal fused [Q | K | V] weights, (in, out),
    #                      1/sqrt(dh) pre-folded into the Q columns
    # b_ref: (1, 3*d)      fused biases (f32), scale pre-folded into bq
    # o_ref: (B*N, d)      head outputs packed along columns (torch.hstack order)
    d = n_heads * d_head

    x = x_ref[...].astype(compute_dtype)                            # (BN, d)

    # One fused projection for every batch row, head and Q/K/V: single MXU matmul.
    qkv = jnp.dot(x, w_ref[...], preferred_element_type=jnp.float32)  # (BN, 3d) f32
    qkv = qkv + b_ref[...]                                             # f32 bias add

    for h in range(n_heads):                                          # static unroll (tiny H)
        q = qkv[:, 0 * d + h * d_head:0 * d + (h + 1) * d_head]       # (BN, dh), pre-scaled
        k = qkv[:, 1 * d + h * d_head:1 * d + (h + 1) * d_head]
        v = qkv[:, 2 * d + h * d_head:2 * d + (h + 1) * d_head]

        # (B*N, dh) -> (B, N, dh): leading-dim split, lane dim unchanged (layout no-op).
        q3 = q.reshape(batch, n_tokens, d_head).astype(compute_dtype)
        k3 = k.reshape(batch, n_tokens, d_head).astype(compute_dtype)
        v3 = v.reshape(batch, n_tokens, d_head).astype(compute_dtype)

        # Scores batched over B; scale already folded into Wq/bq.
        s = jnp.einsum('bqd,bkd->bqk', q3, k3,
                       preferred_element_type=jnp.float32)            # (B, N, N) f32

        # Numerically stable softmax, elementwise math in f32 (v5e-safe).
        m = s.max(axis=-1, keepdims=True)
        p = jnp.exp(s - m)
        attn = p * pl.reciprocal(p.sum(axis=-1, keepdims=True), approx=True)

        o3 = jnp.einsum('bqk,bkd->bqd', attn.astype(compute_dtype), v3,
                        preferred_element_type=jnp.float32)           # (B, N, dh) f32

        # Write this head's columns directly (bounded live range, no concat).
        o_ref[:, h * d_head:(h + 1) * d_head] = (
            o3.reshape(batch * n_tokens, d_head).astype(o_ref.dtype))


def _pack_params(wq, wk, wv, bq, bk, bv, *, d_head, scale, compute_dtype):
    """Pack per-head PyTorch (out,in) weights into a block-diagonal fused (d, 3d)."""
    H = wq.shape[0]
    d = H * d_head

    def block_diag_t(w):                       # (H, dh, dh) -> (d, d) block-diag of Wᵀ
        out = jnp.zeros((d, d), jnp.float32)
        for h in range(H):
            out = out.at[h * d_head:(h + 1) * d_head,
                         h * d_head:(h + 1) * d_head].set(w[h].T)
        return out

    w_fused = jnp.concatenate(
        [block_diag_t(wq) * scale, block_diag_t(wk), block_diag_t(wv)],
        axis=1)                                                        # (d, 3d)
    b_fused = jnp.concatenate(
        [bq.reshape(-1) * scale, bk.reshape(-1), bv.reshape(-1)]).reshape(1, 3 * d)
    return w_fused.astype(compute_dtype), b_fused.astype(jnp.float32)


def my_msa(x, wq, wk, wv, bq, bk, bv, *, n_heads, compute_dtype=jnp.bfloat16):
    """x: (B, N, d); wq/wk/wv: (H, d_head, d_head) PyTorch (out,in); bq/bk/bv: (H, d_head)."""
    B, N, d = x.shape
    assert d % n_heads == 0, "d must be divisible by n_heads"
    d_head = d // n_heads
    scale = 1.0 / (float(d_head) ** 0.5)

    # One-time parameter packing (layout plumbing; fused away when my_msa is jitted
    # with constant weights — see __main__).
    w_fused, b_fused = _pack_params(wq, wk, wv, bq, bk, bv,
                                    d_head=d_head, scale=scale,
                                    compute_dtype=compute_dtype)

    x2d = x.reshape(B * N, d)                                          # free wrapper reshape

    # Rough VMEM footprint (inputs/outputs double-buffered + main temporaries);
    # kept well under v7x's 32 MiB default scoped VMEM (64 MiB physical).
    # TODO(synk): for large N, tile the KV axis with an online-softmax accumulator
    # (flash-style) instead of holding full (B, N, N) scores; use a smaller KV tile on v7x.
    est_bytes = (4 * B * N * d * 4                      # x + out blocks, double-buffered
                 + 2 * (d * 3 * d + 3 * d) * 4          # fused W + bias
                 + B * N * 3 * d * 4                    # qkv
                 + 4 * B * N * N * 4)                   # scores / exp / attn temporaries
    assert est_bytes < 16 * 1024 * 1024, "attention temporaries too large for this kernel"

    kernel = functools.partial(_msa_kernel, batch=B, n_tokens=N, n_heads=n_heads,
                               d_head=d_head, compute_dtype=compute_dtype)

    out2d = pl.pallas_call(
        kernel,
        out_shape=jax.ShapeDtypeStruct((B * N, d), x.dtype),
        grid_spec=pltpu.PrefetchScalarGridSpec(
            num_scalar_prefetch=0,
            grid=(1,),                                   # single step: overhead-dominated shapes
            in_specs=[
                pl.BlockSpec((B * N, d), lambda i: (0, 0)),       # x (flattened tokens)
                pl.BlockSpec((d, 3 * d), lambda i: (0, 0)),       # fused block-diag W
                pl.BlockSpec((1, 3 * d), lambda i: (0, 0)),       # fused bias
            ],
            out_specs=pl.BlockSpec((B * N, d), lambda i: (0, 0)),
        ),
        compiler_params=pltpu.CompilerParams(
            dimension_semantics=("arbitrary",),
            vmem_limit_bytes=32 * 1024 * 1024),
    )(x2d, w_fused, b_fused)

    return out2d.reshape(B, N, d)


def _reference_msa(x, wq, wk, wv, bq, bk, bv, n_heads):
    """Pure-JAX reference mirroring the PyTorch loop."""
    B, N, d = x.shape
    d_head = d // n_heads
    outs = []
    for b in range(B):
        head_outs = []
        for h in range(n_heads):
            seq = x[b, :, h * d_head:(h + 1) * d_head]
            q = seq @ wq[h].T + bq[h]
            k = seq @ wk[h].T + bk[h]
            v = seq @ wv[h].T + bv[h]
            s = (q @ k.T) / (d_head ** 0.5)
            a = jax.nn.softmax(s, axis=-1)
            head_outs.append(a @ v)
        outs.append(jnp.concatenate(head_outs, axis=-1))
    return jnp.stack(outs, axis=0)


if __name__ == "__main__":
    # Small shapes consistent with the module: batch=2, seq=8, d=32, n_heads=2
    B, N, d, H = 2, 8, 32, 2
    d_head = d // H

    key = jax.random.PRNGKey(0)
    kx, kwq, kwk, kwv, kbq, kbk, kbv = jax.random.split(key, 7)

    x = jax.random.normal(kx, (B, N, d), dtype=jnp.float32)
    # Deterministic parameter init (PyTorch Linear weight shape: (out, in))
    wq = jax.random.normal(kwq, (H, d_head, d_head), dtype=jnp.float32) * 0.1
    wk = jax.random.normal(kwk, (H, d_head, d_head), dtype=jnp.float32) * 0.1
    wv = jax.random.normal(kwv, (H, d_head, d_head), dtype=jnp.float32) * 0.1
    bq = jax.random.normal(kbq, (H, d_head), dtype=jnp.float32) * 0.1
    bk = jax.random.normal(kbk, (H, d_head), dtype=jnp.float32) * 0.1
    bv = jax.random.normal(kbv, (H, d_head), dtype=jnp.float32) * 0.1

    ref = _reference_msa(x, wq, wk, wv, bq, bk, bv, n_heads=H)

    # Jit so the wrapper-side weight packing is fused/constant-folded per compile,
    # not re-executed as loose per-call XLA ops.
    msa_f32 = jax.jit(functools.partial(my_msa, n_heads=H, compute_dtype=jnp.float32))
    msa_bf16 = jax.jit(functools.partial(my_msa, n_heads=H))   # default: bf16 MXU operands

    # f32-operand path: only approx-reciprocal (~2^-12) error vs reference.
    out_f32 = jax.block_until_ready(msa_f32(x, wq, wk, wv, bq, bk, bv))
    assert out_f32.shape == (B, N, d)
    assert jnp.allclose(out_f32, ref, atol=2e-3, rtol=2e-3), "f32 path mismatch vs reference"

    # bf16-operand path (default; v6e/v7x friendly): f32 accumulation + f32 softmax,
    # so only bf16 operand rounding contributes — checked at a looser tolerance.
    out_bf16 = jax.block_until_ready(msa_bf16(x, wq, wk, wv, bq, bk, bv))
    assert out_bf16.shape == (B, N, d)
    assert jnp.allclose(out_bf16.astype(jnp.float32), ref, atol=5e-2, rtol=5e-2), \
        "bf16 path mismatch vs reference"

    print("KERNEL_OK")
</pallas_src>

<mosaic_0001>
module attributes {stable_mosaic.version = 11 : i64} {
  func.func @_msa_kernel(%arg0: i32, %arg1: memref<16x32xf32, #tpu.memory_space<vmem>>, %arg2: memref<32x96xf32, #tpu.memory_space<vmem>>, %arg3: memref<1x96xf32, #tpu.memory_space<vmem>>, %arg4: memref<16x32xf32, #tpu.memory_space<vmem>>) attributes {dimension_semantics = [#tpu.dimension_semantics<arbitrary>], iteration_bounds = array<i64: 1>, scalar_prefetch = 0 : i64, scratch_operands = 0 : i64, tpu.core_type = #tpu.core_type<tc>, window_params = [{pipeline_mode = #tpu.pipeline_mode<synchronous>, transform_indices = @transform_0, window_bounds = array<i64: 16, 32>}, {pipeline_mode = #tpu.pipeline_mode<synchronous>, transform_indices = @transform_1, window_bounds = array<i64: 32, 96>}, {pipeline_mode = #tpu.pipeline_mode<synchronous>, transform_indices = @transform_2, window_bounds = array<i64: 1, 96>}, {pipeline_mode = #tpu.pipeline_mode<synchronous>, transform_indices = @transform_3, window_bounds = array<i64: 16, 32>}]} {
    %c0 = arith.constant 0 : index
    %c0_0 = arith.constant 0 : index
    %0 = vector.load %arg1[%c0, %c0_0] : memref<16x32xf32, #tpu.memory_space<vmem>>, vector<16x32xf32>
    %c0_1 = arith.constant 0 : index
    %c0_2 = arith.constant 0 : index
    %1 = vector.load %arg2[%c0_1, %c0_2] : memref<32x96xf32, #tpu.memory_space<vmem>>, vector<32x96xf32>
    %cst = arith.constant dense<0.000000e+00> : vector<16x96xf32>
    %2 = tpu.matmul %0, %1, %cst {dimension_numbers = #tpu.dot_dimension_numbers<[1], [0], [0], [1], [0, 0, 1, 1], [], []>} : vector<16x32xf32>, vector<32x96xf32>, vector<16x96xf32> -> vector<16x96xf32>
    %c0_3 = arith.constant 0 : index
    %c0_4 = arith.constant 0 : index
    %3 = vector.load %arg3[%c0_3, %c0_4] : memref<1x96xf32, #tpu.memory_space<vmem>>, vector<1x96xf32>
    %4 = vector.broadcast %3 : vector<1x96xf32> to vector<16x96xf32>
    %5 = arith.addf %2, %4 : vector<16x96xf32>
    %6 = vector.extract_strided_slice %5 {offsets = [0, 0], sizes = [16, 16], strides = [1, 1]} : vector<16x96xf32> to vector<16x16xf32>
    %7 = vector.extract_strided_slice %5 {offsets = [0, 32], sizes = [16, 16], strides = [1, 1]} : vector<16x96xf32> to vector<16x16xf32>
    %8 = vector.extract_strided_slice %5 {offsets = [0, 64], sizes = [16, 16], strides = [1, 1]} : vector<16x96xf32> to vector<16x16xf32>
    %9 = vector.shape_cast %6 : vector<16x16xf32> to vector<2x8x16xf32>
    %10 = vector.shape_cast %7 : vector<16x16xf32> to vector<2x8x16xf32>
    %11 = vector.shape_cast %8 : vector<16x16xf32> to vector<2x8x16xf32>
    "tpu.trace_start"() <{level = 10 : i32, message = "bqd,bkd->bqk"}> : () -> ()
    %cst_5 = arith.constant dense<0.000000e+00> : vector<2x8x8xf32>
    %12 = tpu.matmul %9, %10, %cst_5 {dimension_numbers = #tpu.dot_dimension_numbers<[2], [2], [1], [1], [0, 0, 0, 1, 1, 1], [0], [0]>} : vector<2x8x16xf32>, vector<2x8x16xf32>, vector<2x8x8xf32> -> vector<2x8x8xf32>
    "tpu.trace_stop"() : () -> ()
    %cst_6 = arith.constant dense<0xFF800000> : vector<2x8xf32>
    %13 = vector.multi_reduction <maximumf>, %12, %cst_6 [2] : vector<2x8x8xf32> to vector<2x8xf32>
    %14 = vector.shape_cast %13 : vector<2x8xf32> to vector<2x8x1xf32>
    %15 = vector.broadcast %14 : vector<2x8x1xf32> to vector<2x8x8xf32>
    %16 = arith.subf %12, %15 : vector<2x8x8xf32>
    %17 = math.exp %16 : vector<2x8x8xf32>
    %cst_7 = arith.constant dense<0.000000e+00> : vector<2x8xf32>
    %18 = vector.multi_reduction <add>, %17, %cst_7 [2] : vector<2x8x8xf32> to vector<2x8xf32>
    %19 = vector.shape_cast %18 : vector<2x8xf32> to vector<2x8x1xf32>
    %20 = tpu.reciprocal %19 {approx = true} : vector<2x8x1xf32> -> vector<2x8x1xf32>
    %21 = vector.broadcast %20 : vector<2x8x1xf32> to vector<2x8x8xf32>
    %22 = arith.mulf %17, %21 : vector<2x8x8xf32>
    "tpu.trace_start"() <{level = 10 : i32, message = "bqk,bkd->bqd"}> : () -> ()
    %cst_8 = arith.constant dense<0.000000e+00> : vector<2x8x16xf32>
    %23 = tpu.matmul %22, %11, %cst_8 {dimension_numbers = #tpu.dot_dimension_numbers<[2], [1], [1], [2], [0, 0, 0, 1, 1, 2], [0], [0]>} : vector<2x8x8xf32>, vector<2x8x16xf32>, vector<2x8x16xf32> -> vector<2x8x16xf32>
    "tpu.trace_stop"() : () -> ()
    %24 = vector.shape_cast %23 : vector<2x8x16xf32> to vector<16x16xf32>
    %c0_9 = arith.constant 0 : index
    %c0_10 = arith.constant 0 : index
    %25 = vector.load %arg4[%c0_9, %c0_10] : memref<16x32xf32, #tpu.memory_space<vmem>>, vector<16x16xf32>
    tpu.vector_store %arg4[%c0_9, %c0_10], %24 {strides = array<i32>} : memref<16x32xf32, #tpu.memory_space<vmem>>, vector<16x16xf32>,
    %26 = vector.extract_strided_slice %5 {offsets = [0, 16], sizes = [16, 16], strides = [1, 1]} : vector<16x96xf32> to vector<16x16xf32>
    %27 = vector.extract_strided_slice %5 {offsets = [0, 48], sizes = [16, 16], strides = [1, 1]} : vector<16x96xf32> to vector<16x16xf32>
    %28 = vector.extract_strided_slice %5 {offsets = [0, 80], sizes = [16, 16], strides = [1, 1]} : vector<16x96xf32> to vector<16x16xf32>
    %29 = vector.shape_cast %26 : vector<16x16xf32> to vector<2x8x16xf32>
    %30 = vector.shape_cast %27 : vector<16x16xf32> to vector<2x8x16xf32>
    %31 = vector.shape_cast %28 : vector<16x16xf32> to vector<2x8x16xf32>
    "tpu.trace_start"() <{level = 10 : i32, message = "bqd,bkd->bqk"}> : () -> ()
    %cst_11 = arith.constant dense<0.000000e+00> : vector<2x8x8xf32>
    %32 = tpu.matmul %29, %30, %cst_11 {dimension_numbers = #tpu.dot_dimension_numbers<[2], [2], [1], [1], [0, 0, 0, 1, 1, 1], [0], [0]>} : vector<2x8x16xf32>, vector<2x8x16xf32>, vector<2x8x8xf32> -> vector<2x8x8xf32>
    "tpu.trace_stop"() : () -> ()
    %cst_12 = arith.constant dense<0xFF800000> : vector<2x8xf32>
    %33 = vector.multi_reduction <maximumf>, %32, %cst_12 [2] : vector<2x8x8xf32> to vector<2x8xf32>
    %34 = vector.shape_cast %33 : vector<2x8xf32> to vector<2x8x1xf32>
    %35 = vector.broadcast %34 : vector<2x8x1xf32> to vector<2x8x8xf32>
    %36 = arith.subf %32, %35 : vector<2x8x8xf32>
    %37 = math.exp %36 : vector<2x8x8xf32>
    %cst_13 = arith.constant dense<0.000000e+00> : vector<2x8xf32>
    %38 = vector.multi_reduction <add>, %37, %cst_13 [2] : vector<2x8x8xf32> to vector<2x8xf32>
    %39 = vector.shape_cast %38 : vector<2x8xf32> to vector<2x8x1xf32>
    %40 = tpu.reciprocal %39 {approx = true} : vector<2x8x1xf32> -> vector<2x8x1xf32>
    %41 = vector.broadcast %40 : vector<2x8x1xf32> to vector<2x8x8xf32>
    %42 = arith.mulf %37, %41 : vector<2x8x8xf32>
    "tpu.trace_start"() <{level = 10 : i32, message = "bqk,bkd->bqd"}> : () -> ()
    %cst_14 = arith.constant dense<0.000000e+00> : vector<2x8x16xf32>
    %43 = tpu.matmul %42, %31, %cst_14 {dimension_numbers = #tpu.dot_dimension_numbers<[2], [1], [1], [2], [0, 0, 0, 1, 1, 2], [0], [0]>} : vector<2x8x8xf32>, vector<2x8x16xf32>, vector<2x8x16xf32> -> vector<2x8x16xf32>
    "tpu.trace_stop"() : () -> ()
    %44 = vector.shape_cast %43 : vector<2x8x16xf32> to vector<16x16xf32>
    %c0_15 = arith.constant 0 : index
    %c16 = arith.constant 16 : index
    %45 = vector.load %arg4[%c0_15, %c16] : memref<16x32xf32, #tpu.memory_space<vmem>>, vector<16x16xf32>
    tpu.vector_store %arg4[%c0_15, %c16], %44 {strides = array<i32>} : memref<16x32xf32, #tpu.memory_space<vmem>>, vector<16x16xf32>,
    return
  }
  func.func @transform_0(%arg0: i32) -> (i32, i32) {
    %c0_i32 = arith.constant 0 : i32
    %c0_i32_0 = arith.constant 0 : i32
    %c0_i32_1 = arith.constant 0 : i32
    return %c0_i32, %c0_i32_0 : i32, i32
  }
  func.func @transform_1(%arg0: i32) -> (i32, i32) {
    %c0_i32 = arith.constant 0 : i32
    %c0_i32_0 = arith.constant 0 : i32
    %c0_i32_1 = arith.constant 0 : i32
    return %c0_i32, %c0_i32_0 : i32, i32
  }
  func.func @transform_2(%arg0: i32) -> (i32, i32) {
    %c0_i32 = arith.constant 0 : i32
    %c0_i32_0 = arith.constant 0 : i32
    %c0_i32_1 = arith.constant 0 : i32
    return %c0_i32, %c0_i32_0 : i32, i32
  }
  func.func @transform_3(%arg0: i32) -> (i32, i32) {
    %c0_i32 = arith.constant 0 : i32
    %c0_i32_0 = arith.constant 0 : i32
    %c0_i32_1 = arith.constant 0 : i32
    return %c0_i32, %c0_i32_0 : i32, i32
  }
}

</mosaic_0001>

<llo_original>
// kernel: my_msa.1
$region0: #{my_msa.1}
  #allocation0 [shape = 'u32[]', space=smem, size = 0x4, offset = 0x4, fixed_abs, tag = 'smem constant byte address 0x4 - core index']
  #allocation1 [shape = 'u32[144,128]{1,0:T(1,128)}', space=vmem, size = 0x12000, scoped, tag = 'internal scratch']
  %s0 = inlined_call_operand.vmem [shape: f32[16,32], index: 0, kind: input, shape index: {}]
  %s1 = inlined_call_operand.vmem [shape: f32[32,96], index: 1, kind: input, shape index: {}]
  %s2 = inlined_call_operand.vmem [shape: f32[1,96], index: 2, kind: input, shape index: {}]
  %s3 = inlined_call_operand.hbm [shape: f32[16,32], index: 3, kind: output, shape index: {}]
  %s4 = sld [smem:[#allocation0]]
  $region22: #{my_msa.1} parent=0
    _
  %s6 = ssub.s32 1, %s4
  %s7 = scalar_select 0, %s6, %s4
  $region1: #{my_msa.1} parent=0
    #allocation2 [shape = 'u8[8192]{0}', space=vmem, size = 0x2000, scoped, tag = 'output window, operand 0, single buffered']
    #allocation3 [shape = 's32[1]{0}', space=sflag, size = 0x4, scoped, tag = 'scoped memory for my_msa.1']
    %8 = vsyncpa [#allocation3], 0
    // Predicated region
    $region2: #{my_msa.1} parent=1 // pred_check
      _
    $region3: #{my_msa.1} parent=1 // pred_check_branch
      %10 = sbr.rel (0) target = $region5
    $region4: #{my_msa.1} parent=1 // pred_region
      _
    $region5: #{my_msa.1} parent=1 // pred_fallthru
      _
    // Predicated region
    $region6: #{my_msa.1} parent=1 // pred_check
      _
    $region7: #{my_msa.1} parent=1 // pred_check_branch
      %12 = sbr.rel (0) target = $region9
    $region8: #{my_msa.1} parent=1 // pred_region
      _
    $region9: #{my_msa.1} parent=1 // pred_fallthru
      _
    // Predicated region
    $region10: #{my_msa.1} parent=1 // pred_check
      _
    $region11: #{my_msa.1} parent=1 // pred_check_branch
      %14 = sbr.rel (0) target = $region13
    $region12: #{my_msa.1} parent=1 // pred_region
      _
    $region13: #{my_msa.1} parent=1 // pred_fallthru
      _
    %v15 = vld [vmem:[%s0] sm:$0xff]
    %v16 = vld [vmem:[%s0 + $0x8] sm:$0xff]
    %v17 = vld [vmem:[%s1] sm:$0xff]
    %v18 = vld [vmem:[%s1 + $0x8] sm:$0xff]
    %v19 = vld [vmem:[%s1 + $0x10] sm:$0xff]
    %v20 = vld [vmem:[%s1 + $0x18] sm:$0xff]
    %v21 = vld [vmem:[%s2] sm:$0x1]
    %v23 = vlaneseq
    %v24 = vshrl.u32 %v23, 7
    %v25 = vsub.s32 0, %v24
    %v26 = vrot.slane %v21, %v25
    %vm28 = vcmask 261120
    %v30 = vsel %vm28, %v15, 0
    %v33 = vsel %vm28, %v16, 0
    %35 = vmatprep.subr.mxu0 0.0
    %36 = vmatpush1.msra.mxu0 %v17
    %37 = vmatprep.subr.mxu0 0.0
    %38 = vmatpush1.msra.mxu0 %v18
    %39 = vmatprep.subr.mxu0 0.0
    %40 = vmatpush1.msra.mxu0 %v19
    %41 = vmatprep.subr.mxu0 0.0
    %42 = vmatpush1.msra.mxu0 %v20
    %43 = vmatprep.subr.mxu0 0.0
    %44 = vmatpush1.msra.mxu0 0.0
    %45 = vmatprep.subr.mxu0 0.0
    %46 = vmatpush1.msra.mxu0 0.0
    %47 = vmatprep.subr.mxu0 0.0
    %48 = vmatpush1.msra.mxu0 0.0
    %49 = vmatprep.subr.mxu0 0.0
    %50 = vmatpush1.msra.mxu0 0.0
    %51 = vmatprep.subr.mxu0 0.0
    %52 = vmatpush1.msra.mxu0 0.0
    %53 = vmatprep.subr.mxu0 0.0
    %54 = vmatpush1.msra.mxu0 0.0
    %55 = vmatprep.subr.mxu0 0.0
    %56 = vmatpush1.msra.mxu0 0.0
    %57 = vmatprep.subr.mxu0 0.0
    %58 = vmatpush1.msra.mxu0 0.0
    %59 = vmatprep.subr.mxu0 0.0
    %60 = vmatpush1.msra.mxu0 0.0
    %61 = vmatprep.subr.mxu0 0.0
    %62 = vmatpush1.msra.mxu0 0.0
    %63 = vmatprep.subr.mxu0 0.0
    %64 = vmatpush1.msra.mxu0 0.0
    %65 = vmatprep.subr.mxu0 0.0
    %66 = vmatpush1.msra.mxu0 0.0
    %67 = vmatprep.subr.mxu0 0.0
    %68 = vmatpush1.msra.mxu0 0.0
    %69 = vmatprep.subr.mxu0 0.0
    %70 = vmatpush1.msra.mxu0 0.0
    %71 = vmatprep.subr.mxu0 0.0
    %72 = vmatpush1.msra.mxu0 0.0
    %73 = vmatprep.subr.mxu0 0.0
    %74 = vmatpush1.msra.mxu0 0.0
    %75 = vmatprep.subr.mxu0 0.0
    %76 = vmatpush1.msra.mxu0 0.0
    %77 = vmatprep.subr.mxu0 0.0
    %78 = vmatpush1.msra.mxu0 0.0
    %79 = vmatprep.subr.mxu0 0.0
    %80 = vmatpush1.msra.mxu0 0.0
    %81 = vmatprep.subr.mxu0 0.0
    %82 = vmatpush1.msra.mxu0 0.0
    %83 = vmatprep.subr.mxu0 0.0
    %84 = vmatpush1.msra.mxu0 0.0
    %85 = vmatprep.subr.mxu0 0.0
    %86 = vmatpush1.msra.mxu0 0.0
    %87 = vmatprep.subr.mxu0 0.0
    %88 = vmatpush1.msra.mxu0 0.0
    %89 = vmatprep.subr.mxu0 0.0
    %90 = vmatpush1.msra.mxu0 0.0
    %91 = vmatprep.subr.mxu0 0.0
    %92 = vmatpush1.msra.mxu0 0.0
    %93 = vmatprep.subr.mxu0 0.0
    %94 = vmatpush1.msra.mxu0 0.0
    %95 = vmatprep.subr.mxu0 0.0
    %96 = vmatpush1.msra.mxu0 0.0
    %97 = vmatprep.subr.mxu0 0.0
    %98 = vmatpush1.msra.mxu0 0.0
    %99 = vmatprep.mubr.f32.mxu0 0.0
    %100 = vmatmul.mubr.f32.gmra.mrb[0].mxu0 %v30
    %v101 = vpop.f32.mrb[0].mxu0
    %v102 = vadd.f32 %v26, %v101
    %v103 = vpop.f32.mrb[0].mxu0
    %104 = vmatprep.mubr.f32.mxu0 0.0
    %105 = vmatmul.mubr.f32.gmra.mrb[0].mxu0 %v33
    %v106 = vpop.f32.mrb[0].mxu0
    %v107 = vadd.f32 %v26, %v106
    %v108 = vpop.f32.mrb[0].mxu0
    %109 = vdwg.mxu0
    %111 = vrot.lane.b32.xlu0 %v102, 96
    %v112 = vpop.permute.xlu0 %111
    %vm113 = vcmask 130048
    %v114 = vsel %vm113, %v102, 0
    %v116 = vsel %vm113, %v112, 0
    %118 = vmatprep.subr.mxu0 0.0
    %119 = vmatpush1.xpose.msra.mxu0 %v116
    %120 = vmatprep.subr.mxu0 0.0
    %121 = vmatpush1.xpose.msra.mxu0 0.0
    %122 = vmatprep.subr.mxu0 0.0
    %123 = vmatpush1.xpose.msra.mxu0 0.0
    %124 = vmatprep.subr.mxu0 0.0
    %125 = vmatpush1.xpose.msra.mxu0 0.0
    %126 = vmatprep.subr.mxu0 0.0
    %127 = vmatpush1.xpose.msra.mxu0 0.0
    %128 = vmatprep.subr.mxu0 0.0
    %129 = vmatpush1.xpose.msra.mxu0 0.0
    %130 = vmatprep.subr.mxu0 0.0
    %131 = vmatpush1.xpose.msra.mxu0 0.0
    %132 = vmatprep.subr.mxu0 0.0
    %133 = vmatpush1.xpose.msra.mxu0 0.0
    %134 = vmatprep.subr.mxu0 0.0
    %135 = vmatpush1.xpose.msra.mxu0 0.0
    %136 = vmatprep.subr.mxu0 0.0
    %137 = vmatpush1.xpose.msra.mxu0 0.0
    %138 = vmatprep.subr.mxu0 0.0
    %139 = vmatpush1.xpose.msra.mxu0 0.0
    %140 = vmatprep.subr.mxu0 0.0
    %141 = vmatpush1.xpose.msra.mxu0 0.0
    %142 = vmatprep.subr.mxu0 0.0
    %143 = vmatpush1.xpose.msra.mxu0 0.0
    %144 = vmatprep.subr.mxu0 0.0
    %145 = vmatpush1.xpose.msra.mxu0 0.0
    %146 = vmatprep.subr.mxu0 0.0
    %147 = vmatpush1.xpose.msra.mxu0 0.0
    %148 = vmatprep.subr.mxu0 0.0
    %149 = vmatpush1.xpose.msra.mxu0 0.0
    %150 = vmatprep.subr.mxu0 0.0
    %151 = vmatpush1.xpose.msra.mxu0 0.0
    %152 = vmatprep.subr.mxu0 0.0
    %153 = vmatpush1.xpose.msra.mxu0 0.0
    %154 = vmatprep.subr.mxu0 0.0
    %155 = vmatpush1.xpose.msra.mxu0 0.0
    %156 = vmatprep.subr.mxu0 0.0
    %157 = vmatpush1.xpose.msra.mxu0 0.0
    %158 = vmatprep.subr.mxu0 0.0
    %159 = vmatpush1.xpose.msra.mxu0 0.0
    %160 = vmatprep.subr.mxu0 0.0
    %161 = vmatpush1.xpose.msra.mxu0 0.0
    %162 = vmatprep.subr.mxu0 0.0
    %163 = vmatpush1.xpose.msra.mxu0 0.0
    %164 = vmatprep.subr.mxu0 0.0
    %165 = vmatpush1.xpose.msra.mxu0 0.0
    %166 = vmatprep.subr.mxu0 0.0
    %167 = vmatpush1.xpose.msra.mxu0 0.0
    %168 = vmatprep.subr.mxu0 0.0
    %169 = vmatpush1.xpose.msra.mxu0 0.0
    %170 = vmatprep.subr.mxu0 0.0
    %171 = vmatpush1.xpose.msra.mxu0 0.0
    %172 = vmatprep.subr.mxu0 0.0
    %173 = vmatpush1.xpose.msra.mxu0 0.0
    %174 = vmatprep.subr.mxu0 0.0
    %175 = vmatpush1.xpose.msra.mxu0 0.0
    %176 = vmatprep.subr.mxu0 0.0
    %177 = vmatpush1.xpose.msra.mxu0 0.0
    %178 = vmatprep.subr.mxu0 0.0
    %179 = vmatpush1.xpose.msra.mxu0 0.0
    %180 = vmatprep.subr.mxu0 0.0
    %181 = vmatpush1.xpose.msra.mxu0 0.0
    %182 = vmatprep.mubr.f32.mxu0 0.0
    %183 = vmatmul.mubr.f32.gmra.mrb[0].mxu0 %v114
    %v184 = vpop.f32.mrb[0].mxu0
    %v185 = vadd.f32 0.0, %v184
    %v186 = vpop.f32.mrb[0].mxu0
    %187 = vdwg.mxu0
    %189 = vrot.lane.b32.xlu0 %v107, 96
    %v190 = vpop.permute.xlu0 %189
    %v191 = vsel %vm113, %v107, 0
    %v193 = vsel %vm113, %v190, 0
    %195 = vmatprep.subr.mxu0 0.0
    %196 = vmatpush1.xpose.msra.mxu0 %v193
    %197 = vmatprep.subr.mxu0 0.0
    %198 = vmatpush1.xpose.msra.mxu0 0.0
    %199 = vmatprep.subr.mxu0 0.0
    %200 = vmatpush1.xpose.msra.mxu0 0.0
    %201 = vmatprep.subr.mxu0 0.0
    %202 = vmatpush1.xpose.msra.mxu0 0.0
    %203 = vmatprep.subr.mxu0 0.0
    %204 = vmatpush1.xpose.msra.mxu0 0.0
    %205 = vmatprep.subr.mxu0 0.0
    %206 = vmatpush1.xpose.msra.mxu0 0.0
    %207 = vmatprep.subr.mxu0 0.0
    %208 = vmatpush1.xpose.msra.mxu0 0.0
    %209 = vmatprep.subr.mxu0 0.0
    %210 = vmatpush1.xpose.msra.mxu0 0.0
    %211 = vmatprep.subr.mxu0 0.0
    %212 = vmatpush1.xpose.msra.mxu0 0.0
    %213 = vmatprep.subr.mxu0 0.0
    %214 = vmatpush1.xpose.msra.mxu0 0.0
    %215 = vmatprep.subr.mxu0 0.0
    %216 = vmatpush1.xpose.msra.mxu0 0.0
    %217 = vmatprep.subr.mxu0 0.0
    %218 = vmatpush1.xpose.msra.mxu0 0.0
    %219 = vmatprep.subr.mxu0 0.0
    %220 = vmatpush1.xpose.msra.mxu0 0.0
    %221 = vmatprep.subr.mxu0 0.0
    %222 = vmatpush1.xpose.msra.mxu0 0.0
    %223 = vmatprep.subr.mxu0 0.0
    %224 = vmatpush1.xpose.msra.mxu0 0.0
    %225 = vmatprep.subr.mxu0 0.0
    %226 = vmatpush1.xpose.msra.mxu0 0.0
    %227 = vmatprep.subr.mxu0 0.0
    %228 = vmatpush1.xpose.msra.mxu0 0.0
    %229 = vmatprep.subr.mxu0 0.0
    %230 = vmatpush1.xpose.msra.mxu0 0.0
    %231 = vmatprep.subr.mxu0 0.0
    %232 = vmatpush1.xpose.msra.mxu0 0.0
    %233 = vmatprep.subr.mxu0 0.0
    %234 = vmatpush1.xpose.msra.mxu0 0.0
    %235 = vmatprep.subr.mxu0 0.0
    %236 = vmatpush1.xpose.msra.mxu0 0.0
    %237 = vmatprep.subr.mxu0 0.0
    %238 = vmatpush1.xpose.msra.mxu0 0.0
    %239 = vmatprep.subr.mxu0 0.0
    %240 = vmatpush1.xpose.msra.mxu0 0.0
    %241 = vmatprep.subr.mxu0 0.0
    %242 = vmatpush1.xpose.msra.mxu0 0.0
    %243 = vmatprep.subr.mxu0 0.0
    %244 = vmatpush1.xpose.msra.mxu0 0.0
    %245 = vmatprep.subr.mxu0 0.0
    %246 = vmatpush1.xpose.msra.mxu0 0.0
    %247 = vmatprep.subr.mxu0 0.0
    %248 = vmatpush1.xpose.msra.mxu0 0.0
    %249 = vmatprep.subr.mxu0 0.0
    %250 = vmatpush1.xpose.msra.mxu0 0.0
    %251 = vmatprep.subr.mxu0 0.0
    %252 = vmatpush1.xpose.msra.mxu0 0.0
    %253 = vmatprep.subr.mxu0 0.0
    %254 = vmatpush1.xpose.msra.mxu0 0.0
    %255 = vmatprep.subr.mxu0 0.0
    %256 = vmatpush1.xpose.msra.mxu0 0.0
    %257 = vmatprep.subr.mxu0 0.0
    %258 = vmatpush1.xpose.msra.mxu0 0.0
    %259 = vmatprep.mubr.f32.mxu0 0.0
    %260 = vmatmul.mubr.f32.gmra.mrb[0].mxu0 %v191
    %v261 = vpop.f32.mrb[0].mxu0
    %v262 = vadd.f32 0.0, %v261
    %v263 = vpop.f32.mrb[0].mxu0
    %264 = vdwg.mxu0
    %vm265 = vcmask 64512
    %v266 = vsel %vm265, %v185, -inf
    %267 = vmax.xlane.f32.xlu0 %v266
    %v268 = vpop.xlane.xlu0 %267
    %v269 = vsel %vm265, %v262, -inf
    %270 = vmax.xlane.f32.xlu0 %v269
    %v271 = vpop.xlane.xlu0 %270
    %v272 = vsub.f32 %v185, %v268
    %v273 = vsub.f32 %v262, %v271
    %v274 = vmul.f32 %v272, 1.442695
    %v275 = vpow.pop %v274
    %v276 = vmul.f32 %v273, 1.442695
    %v277 = vpow.pop %v276
    %v278 = vsel %vm265, %v275, 0.0
    %279 = vadd.xlane.f32.xlu0 %v278
    %v280 = vpop.xlane.xlu0 %279
    %v281 = vsel %vm265, %v277, 0.0
    %282 = vadd.xlane.f32.xlu0 %v281
    %v283 = vpop.xlane.xlu0 %282
    %v284 = vrcp.pop %v280
    %v285 = vrcp.pop %v283
    %v286 = vmul.f32 %v275, %v284
    %v287 = vmul.f32 %v277, %v285
    %288 = vrot.lane.b32.xlu0 %v102, 64
    %v289 = vpop.permute.xlu0 %288
    %v292 = vsel %vm265, %v286, 0
    %294 = vmatprep.subr.mxu0 0.0
    %295 = vmatpush1.msra.mxu0 %v289
    %296 = vmatprep.subr.mxu0 0.0
    %297 = vmatpush1.msra.mxu0 0.0
    %298 = vmatprep.subr.mxu0 0.0
    %299 = vmatpush1.msra.mxu0 0.0
    %300 = vmatprep.subr.mxu0 0.0
    %301 = vmatpush1.msra.mxu0 0.0
    %302 = vmatprep.subr.mxu0 0.0
    %303 = vmatpush1.msra.mxu0 0.0
    %304 = vmatprep.subr.mxu0 0.0
    %305 = vmatpush1.msra.mxu0 0.0
    %306 = vmatprep.subr.mxu0 0.0
    %307 = vmatpush1.msra.mxu0 0.0
    %308 = vmatprep.subr.mxu0 0.0
    %309 = vmatpush1.msra.mxu0 0.0
    %310 = vmatprep.subr.mxu0 0.0
    %311 = vmatpush1.msra.mxu0 0.0
    %312 = vmatprep.subr.mxu0 0.0
    %313 = vmatpush1.msra.mxu0 0.0
    %314 = vmatprep.subr.mxu0 0.0
    %315 = vmatpush1.msra.mxu0 0.0
    %316 = vmatprep.subr.mxu0 0.0
    %317 = vmatpush1.msra.mxu0 0.0
    %318 = vmatprep.subr.mxu0 0.0
    %319 = vmatpush1.msra.mxu0 0.0
    %320 = vmatprep.subr.mxu0 0.0
    %321 = vmatpush1.msra.mxu0 0.0
    %322 = vmatprep.subr.mxu0 0.0
    %323 = vmatpush1.msra.mxu0 0.0
    %324 = vmatprep.subr.mxu0 0.0
    %325 = vmatpush1.msra.mxu0 0.0
    %326 = vmatprep.subr.mxu0 0.0
    %327 = vmatpush1.msra.mxu0 0.0
    %328 = vmatprep.subr.mxu0 0.0
    %329 = vmatpush1.msra.mxu0 0.0
    %330 = vmatprep.subr.mxu0 0.0
    %331 = vmatpush1.msra.mxu0 0.0
    %332 = vmatprep.subr.mxu0 0.0
    %333 = vmatpush1.msra.mxu0 0.0
    %334 = vmatprep.subr.mxu0 0.0
    %335 = vmatpush1.msra.mxu0 0.0
    %336 = vmatprep.subr.mxu0 0.0
    %337 = vmatpush1.msra.mxu0 0.0
    %338 = vmatprep.subr.mxu0 0.0
    %339 = vmatpush1.msra.mxu0 0.0
    %340 = vmatprep.subr.mxu0 0.0
    %341 = vmatpush1.msra.mxu0 0.0
    %342 = vmatprep.subr.mxu0 0.0
    %343 = vmatpush1.msra.mxu0 0.0
    %344 = vmatprep.subr.mxu0 0.0
    %345 = vmatpush1.msra.mxu0 0.0
    %346 = vmatprep.subr.mxu0 0.0
    %347 = vmatpush1.msra.mxu0 0.0
    %348 = vmatprep.subr.mxu0 0.0
    %349 = vmatpush1.msra.mxu0 0.0
    %350 = vmatprep.subr.mxu0 0.0
    %351 = vmatpush1.msra.mxu0 0.0
    %352 = vmatprep.subr.mxu0 0.0
    %353 = vmatpush1.msra.mxu0 0.0
    %354 = vmatprep.subr.mxu0 0.0
    %355 = vmatpush1.msra.mxu0 0.0
    %356 = vmatprep.subr.mxu0 0.0
    %357 = vmatpush1.msra.mxu0 0.0
    %358 = vmatprep.mubr.f32.mxu0 0.0
    %359 = vmatmul.mubr.f32.gmra.mrb[0].mxu0 %v292
    %v360 = vpop.f32.mrb[0].mxu0
    %v361 = vadd.f32 0.0, %v360
    %v362 = vpop.f32.mrb[0].mxu0
    %363 = vdwg.mxu0
    %364 = vrot.lane.b32.xlu0 %v107, 64
    %v365 = vpop.permute.xlu0 %364
    %v368 = vsel %vm265, %v287, 0
    %370 = vmatprep.subr.mxu0 0.0
    %371 = vmatpush1.msra.mxu0 %v365
    %372 = vmatprep.subr.mxu0 0.0
    %373 = vmatpush1.msra.mxu0 0.0
    %374 = vmatprep.subr.mxu0 0.0
    %375 = vmatpush1.msra.mxu0 0.0
    %376 = vmatprep.subr.mxu0 0.0
    %377 = vmatpush1.msra.mxu0 0.0
    %378 = vmatprep.subr.mxu0 0.0
    %379 = vmatpush1.msra.mxu0 0.0
    %380 = vmatprep.subr.mxu0 0.0
    %381 = vmatpush1.msra.mxu0 0.0
    %382 = vmatprep.subr.mxu0 0.0
    %383 = vmatpush1.msra.mxu0 0.0
    %384 = vmatprep.subr.mxu0 0.0
    %385 = vmatpush1.msra.mxu0 0.0
    %386 = vmatprep.subr.mxu0 0.0
    %387 = vmatpush1.msra.mxu0 0.0
    %388 = vmatprep.subr.mxu0 0.0
    %389 = vmatpush1.msra.mxu0 0.0
    %390 = vmatprep.subr.mxu0 0.0
    %391 = vmatpush1.msra.mxu0 0.0
    %392 = vmatprep.subr.mxu0 0.0
    %393 = vmatpush1.msra.mxu0 0.0
    %394 = vmatprep.subr.mxu0 0.0
    %395 = vmatpush1.msra.mxu0 0.0
    %396 = vmatprep.subr.mxu0 0.0
    %397 = vmatpush1.msra.mxu0 0.0
    %398 = vmatprep.subr.mxu0 0.0
    %399 = vmatpush1.msra.mxu0 0.0
    %400 = vmatprep.subr.mxu0 0.0
    %401 = vmatpush1.msra.mxu0 0.0
    %402 = vmatprep.subr.mxu0 0.0
    %403 = vmatpush1.msra.mxu0 0.0
    %404 = vmatprep.subr.mxu0 0.0
    %405 = vmatpush1.msra.mxu0 0.0
    %406 = vmatprep.subr.mxu0 0.0
    %407 = vmatpush1.msra.mxu0 0.0
    %408 = vmatprep.subr.mxu0 0.0
    %409 = vmatpush1.msra.mxu0 0.0
    %410 = vmatprep.subr.mxu0 0.0
    %411 = vmatpush1.msra.mxu0 0.0
    %412 = vmatprep.subr.mxu0 0.0
    %413 = vmatpush1.msra.mxu0 0.0
    %414 = vmatprep.subr.mxu0 0.0
    %415 = vmatpush1.msra.mxu0 0.0
    %416 = vmatprep.subr.mxu0 0.0
    %417 = vmatpush1.msra.mxu0 0.0
    %418 = vmatprep.subr.mxu0 0.0
    %419 = vmatpush1.msra.mxu0 0.0
    %420 = vmatprep.subr.mxu0 0.0
    %421 = vmatpush1.msra.mxu0 0.0
    %422 = vmatprep.subr.mxu0 0.0
    %423 = vmatpush1.msra.mxu0 0.0
    %424 = vmatprep.subr.mxu0 0.0
    %425 = vmatpush1.msra.mxu0 0.0
    %426 = vmatprep.subr.mxu0 0.0
    %427 = vmatpush1.msra.mxu0 0.0
    %428 = vmatprep.subr.mxu0 0.0
    %429 = vmatpush1.msra.mxu0 0.0
    %430 = vmatprep.subr.mxu0 0.0
    %431 = vmatpush1.msra.mxu0 0.0
    %432 = vmatprep.subr.mxu0 0.0
    %433 = vmatpush1.msra.mxu0 0.0
    %434 = vmatprep.mubr.f32.mxu0 0.0
    %435 = vmatmul.mubr.f32.gmra.mrb[0].mxu0 %v368
    %v436 = vpop.f32.mrb[0].mxu0
    %v437 = vadd.f32 0.0, %v436
    %v438 = vpop.f32.mrb[0].mxu0
    %439 = vdwg.mxu0
    %440 = vst.msk [vmem:[#allocation2] sm:$0xff] %vm113, %v361
    %441 = vst.msk [vmem:[#allocation2 + $0x8] sm:$0xff] %vm113, %v437
    %442 = vrot.lane.b32.xlu0 %v102, 112
    %v443 = vpop.permute.xlu0 %442
    %444 = vrot.lane.b32.xlu0 %v102, 80
    %v445 = vpop.permute.xlu0 %444
    %v446 = vsel %vm113, %v443, 0
    %v448 = vsel %vm113, %v445, 0
    %450 = vmatprep.subr.mxu0 0.0
    %451 = vmatpush1.xpose.msra.mxu0 %v448
    %452 = vmatprep.subr.mxu0 0.0
    %453 = vmatpush1.xpose.msra.mxu0 0.0
    %454 = vmatprep.subr.mxu0 0.0
    %455 = vmatpush1.xpose.msra.mxu0 0.0
    %456 = vmatprep.subr.mxu0 0.0
    %457 = vmatpush1.xpose.msra.mxu0 0.0
    %458 = vmatprep.subr.mxu0 0.0
    %459 = vmatpush1.xpose.msra.mxu0 0.0
    %460 = vmatprep.subr.mxu0 0.0
    %461 = vmatpush1.xpose.msra.mxu0 0.0
    %462 = vmatprep.subr.mxu0 0.0
    %463 = vmatpush1.xpose.msra.mxu0 0.0
    %464 = vmatprep.subr.mxu0 0.0
    %465 = vmatpush1.xpose.msra.mxu0 0.0
    %466 = vmatprep.subr.mxu0 0.0
    %467 = vmatpush1.xpose.msra.mxu0 0.0
    %468 = vmatprep.subr.mxu0 0.0
    %469 = vmatpush1.xpose.msra.mxu0 0.0
    %470 = vmatprep.subr.mxu0 0.0
    %471 = vmatpush1.xpose.msra.mxu0 0.0
    %472 = vmatprep.subr.mxu0 0.0
    %473 = vmatpush1.xpose.msra.mxu0 0.0
    %474 = vmatprep.subr.mxu0 0.0
    %475 = vmatpush1.xpose.msra.mxu0 0.0
    %476 = vmatprep.subr.mxu0 0.0
    %477 = vmatpush1.xpose.msra.mxu0 0.0
    %478 = vmatprep.subr.mxu0 0.0
    %479 = vmatpush1.xpose.msra.mxu0 0.0
    %480 = vmatprep.subr.mxu0 0.0
    %481 = vmatpush1.xpose.msra.mxu0 0.0
    %482 = vmatprep.subr.mxu0 0.0
    %483 = vmatpush1.xpose.msra.mxu0 0.0
    %484 = vmatprep.subr.mxu0 0.0
    %485 = vmatpush1.xpose.msra.mxu0 0.0
    %486 = vmatprep.subr.mxu0 0.0
    %487 = vmatpush1.xpose.msra.mxu0 0.0
    %488 = vmatprep.subr.mxu0 0.0
    %489 = vmatpush1.xpose.msra.mxu0 0.0
    %490 = vmatprep.subr.mxu0 0.0
    %491 = vmatpush1.xpose.msra.mxu0 0.0
    %492 = vmatprep.subr.mxu0 0.0
    %493 = vmatpush1.xpose.msra.mxu0 0.0
    %494 = vmatprep.subr.mxu0 0.0
    %495 = vmatpush1.xpose.msra.mxu0 0.0
    %496 = vmatprep.subr.mxu0 0.0
    %497 = vmatpush1.xpose.msra.mxu0 0.0
    %498 = vmatprep.subr.mxu0 0.0
    %499 = vmatpush1.xpose.msra.mxu0 0.0
    %500 = vmatprep.subr.mxu0 0.0
    %501 = vmatpush1.xpose.msra.mxu0 0.0
    %502 = vmatprep.subr.mxu0 0.0
    %503 = vmatpush1.xpose.msra.mxu0 0.0
    %504 = vmatprep.subr.mxu0 0.0
    %505 = vmatpush1.xpose.msra.mxu0 0.0
    %506 = vmatprep.subr.mxu0 0.0
    %507 = vmatpush1.xpose.msra.mxu0 0.0
    %508 = vmatprep.subr.mxu0 0.0
    %509 = vmatpush1.xpose.msra.mxu0 0.0
    %510 = vmatprep.subr.mxu0 0.0
    %511 = vmatpush1.xpose.msra.mxu0 0.0
    %512 = vmatprep.subr.mxu0 0.0
    %513 = vmatpush1.xpose.msra.mxu0 0.0
    %514 = vmatprep.mubr.f32.mxu0 0.0
    %515 = vmatmul.mubr.f32.gmra.mrb[0].mxu0 %v446
    %v516 = vpop.f32.mrb[0].mxu0
    %v517 = vadd.f32 0.0, %v516
    %v518 = vpop.f32.mrb[0].mxu0
    %519 = vdwg.mxu0
    %520 = vrot.lane.b32.xlu0 %v107, 112
    %v521 = vpop.permute.xlu0 %520
    %522 = vrot.lane.b32.xlu0 %v107, 80
    %v523 = vpop.permute.xlu0 %522
    %v524 = vsel %vm113, %v521, 0
    %v526 = vsel %vm113, %v523, 0
    %528 = vmatprep.subr.mxu0 0.0
    %529 = vmatpush1.xpose.msra.mxu0 %v526
    %530 = vmatprep.subr.mxu0 0.0
    %531 = vmatpush1.xpose.msra.mxu0 0.0
    %532 = vmatprep.subr.mxu0 0.0
    %533 = vmatpush1.xpose.msra.mxu0 0.0
    %534 = vmatprep.subr.mxu0 0.0
    %535 = vmatpush1.xpose.msra.mxu0 0.0
    %536 = vmatprep.subr.mxu0 0.0
    %537 = vmatpush1.xpose.msra.mxu0 0.0
    %538 = vmatprep.subr.mxu0 0.0
    %539 = vmatpush1.xpose.msra.mxu0 0.0
    %540 = vmatprep.subr.mxu0 0.0
    %541 = vmatpush1.xpose.msra.mxu0 0.0
    %542 = vmatprep.subr.mxu0 0.0
    %543 = vmatpush1.xpose.msra.mxu0 0.0
    %544 = vmatprep.subr.mxu0 0.0
    %545 = vmatpush1.xpose.msra.mxu0 0.0
    %546 = vmatprep.subr.mxu0 0.0
    %547 = vmatpush1.xpose.msra.mxu0 0.0
    %548 = vmatprep.subr.mxu0 0.0
    %549 = vmatpush1.xpose.msra.mxu0 0.0
    %550 = vmatprep.subr.mxu0 0.0
    %551 = vmatpush1.xpose.msra.mxu0 0.0
    %552 = vmatprep.subr.mxu0 0.0
    %553 = vmatpush1.xpose.msra.mxu0 0.0
    %554 = vmatprep.subr.mxu0 0.0
    %555 = vmatpush1.xpose.msra.mxu0 0.0
    %556 = vmatprep.subr.mxu0 0.0
    %557 = vmatpush1.xpose.msra.mxu0 0.0
    %558 = vmatprep.subr.mxu0 0.0
    %559 = vmatpush1.xpose.msra.mxu0 0.0
    %560 = vmatprep.subr.mxu0 0.0
    %561 = vmatpush1.xpose.msra.mxu0 0.0
    %562 = vmatprep.subr.mxu0 0.0
    %563 = vmatpush1.xpose.msra.mxu0 0.0
    %564 = vmatprep.subr.mxu0 0.0
    %565 = vmatpush1.xpose.msra.mxu0 0.0
    %566 = vmatprep.subr.mxu0 0.0
    %567 = vmatpush1.xpose.msra.mxu0 0.0
    %568 = vmatprep.subr.mxu0 0.0
    %569 = vmatpush1.xpose.msra.mxu0 0.0
    %570 = vmatprep.subr.mxu0 0.0
    %571 = vmatpush1.xpose.msra.mxu0 0.0
    %572 = vmatprep.subr.mxu0 0.0
    %573 = vmatpush1.xpose.msra.mxu0 0.0
    %574 = vmatprep.subr.mxu0 0.0
    %575 = vmatpush1.xpose.msra.mxu0 0.0
    %576 = vmatprep.subr.mxu0 0.0
    %577 = vmatpush1.xpose.msra.mxu0 0.0
    %578 = vmatprep.subr.mxu0 0.0
    %579 = vmatpush1.xpose.msra.mxu0 0.0
    %580 = vmatprep.subr.mxu0 0.0
    %581 = vmatpush1.xpose.msra.mxu0 0.0
    %582 = vmatprep.subr.mxu0 0.0
    %583 = vmatpush1.xpose.msra.mxu0 0.0
    %584 = vmatprep.subr.mxu0 0.0
    %585 = vmatpush1.xpose.msra.mxu0 0.0
    %586 = vmatprep.subr.mxu0 0.0
    %587 = vmatpush1.xpose.msra.mxu0 0.0
    %588 = vmatprep.subr.mxu0 0.0
    %589 = vmatpush1.xpose.msra.mxu0 0.0
    %590 = vmatprep.subr.mxu0 0.0
    %591 = vmatpush1.xpose.msra.mxu0 0.0
    %592 = vmatprep.mubr.f32.mxu0 0.0
    %593 = vmatmul.mubr.f32.gmra.mrb[0].mxu0 %v524
    %v594 = vpop.f32.mrb[0].mxu0
    %v595 = vadd.f32 0.0, %v594
    %v596 = vpop.f32.mrb[0].mxu0
    %597 = vdwg.mxu0
    %v598 = vsel %vm265, %v517, -inf
    %599 = vmax.xlane.f32.xlu0 %v598
    %v600 = vpop.xlane.xlu0 %599
    %v601 = vsel %vm265, %v595, -inf
    %602 = vmax.xlane.f32.xlu0 %v601
    %v603 = vpop.xlane.xlu0 %602
    %v604 = vsub.f32 %v517, %v600
    %v605 = vsub.f32 %v595, %v603
    %v606 = vmul.f32 %v604, 1.442695
    %v607 = vpow.pop %v606
    %v608 = vmul.f32 %v605, 1.442695
    %v609 = vpow.pop %v608
    %v610 = vsel %vm265, %v607, 0.0
    %611 = vadd.xlane.f32.xlu0 %v610
    %v612 = vpop.xlane.xlu0 %611
    %v613 = vsel %vm265, %v609, 0.0
    %614 = vadd.xlane.f32.xlu0 %v613
    %v615 = vpop.xlane.xlu0 %614
    %v616 = vrcp.pop %v612
    %v617 = vrcp.pop %v615
    %v618 = vmul.f32 %v607, %v616
    %v619 = vmul.f32 %v609, %v617
    %620 = vrot.lane.b32.xlu0 %v102, 48
    %v621 = vpop.permute.xlu0 %620
    %v624 = vsel %vm265, %v618, 0
    %626 = vmatprep.subr.mxu0 0.0
    %627 = vmatpush1.msra.mxu0 %v621
    %628 = vmatprep.subr.mxu0 0.0
    %629 = vmatpush1.msra.mxu0 0.0
    %630 = vmatprep.subr.mxu0 0.0
    %631 = vmatpush1.msra.mxu0 0.0
    %632 = vmatprep.subr.mxu0 0.0
    %633 = vmatpush1.msra.mxu0 0.0
    %634 = vmatprep.subr.mxu0 0.0
    %635 = vmatpush1.msra.mxu0 0.0
    %636 = vmatprep.subr.mxu0 0.0
    %637 = vmatpush1.msra.mxu0 0.0
    %638 = vmatprep.subr.mxu0 0.0
    %639 = vmatpush1.msra.mxu0 0.0
    %640 = vmatprep.subr.mxu0 0.0
    %641 = vmatpush1.msra.mxu0 0.0
    %642 = vmatprep.subr.mxu0 0.0
    %643 = vmatpush1.msra.mxu0 0.0
    %644 = vmatprep.subr.mxu0 0.0
    %645 = vmatpush1.msra.mxu0 0.0
    %646 = vmatprep.subr.mxu0 0.0
    %647 = vmatpush1.msra.mxu0 0.0
    %648 = vmatprep.subr.mxu0 0.0
    %649 = vmatpush1.msra.mxu0 0.0
    %650 = vmatprep.subr.mxu0 0.0
    %651 = vmatpush1.msra.mxu0 0.0
    %652 = vmatprep.subr.mxu0 0.0
    %653 = vmatpush1.msra.mxu0 0.0
    %654 = vmatprep.subr.mxu0 0.0
    %655 = vmatpush1.msra.mxu0 0.0
    %656 = vmatprep.subr.mxu0 0.0
    %657 = vmatpush1.msra.mxu0 0.0
    %658 = vmatprep.subr.mxu0 0.0
    %659 = vmatpush1.msra.mxu0 0.0
    %660 = vmatprep.subr.mxu0 0.0
    %661 = vmatpush1.msra.mxu0 0.0
    %662 = vmatprep.subr.mxu0 0.0
    %663 = vmatpush1.msra.mxu0 0.0
    %664 = vmatprep.subr.mxu0 0.0
    %665 = vmatpush1.msra.mxu0 0.0
    %666 = vmatprep.subr.mxu0 0.0
    %667 = vmatpush1.msra.mxu0 0.0
    %668 = vmatprep.subr.mxu0 0.0
    %669 = vmatpush1.msra.mxu0 0.0
    %670 = vmatprep.subr.mxu0 0.0
    %671 = vmatpush1.msra.mxu0 0.0
    %672 = vmatprep.subr.mxu0 0.0
    %673 = vmatpush1.msra.mxu0 0.0
    %674 = vmatprep.subr.mxu0 0.0
    %675 = vmatpush1.msra.mxu0 0.0
    %676 = vmatprep.subr.mxu0 0.0
    %677 = vmatpush1.msra.mxu0 0.0
    %678 = vmatprep.subr.mxu0 0.0
    %679 = vmatpush1.msra.mxu0 0.0
    %680 = vmatprep.subr.mxu0 0.0
    %681 = vmatpush1.msra.mxu0 0.0
    %682 = vmatprep.subr.mxu0 0.0
    %683 = vmatpush1.msra.mxu0 0.0
    %684 = vmatprep.subr.mxu0 0.0
    %685 = vmatpush1.msra.mxu0 0.0
    %686 = vmatprep.subr.mxu0 0.0
    %687 = vmatpush1.msra.mxu0 0.0
    %688 = vmatprep.subr.mxu0 0.0
    %689 = vmatpush1.msra.mxu0 0.0
    %690 = vmatprep.mubr.f32.mxu0 0.0
    %691 = vmatmul.mubr.f32.gmra.mrb[0].mxu0 %v624
    %v692 = vpop.f32.mrb[0].mxu0
    %v693 = vadd.f32 0.0, %v692
    %v694 = vpop.f32.mrb[0].mxu0
    %695 = vdwg.mxu0
    %696 = vrot.lane.b32.xlu0 %v107, 48
    %v697 = vpop.permute.xlu0 %696
    %v700 = vsel %vm265, %v619, 0
    %702 = vmatprep.subr.mxu0 0.0
    %703 = vmatpush1.msra.mxu0 %v697
    %704 = vmatprep.subr.mxu0 0.0
    %705 = vmatpush1.msra.mxu0 0.0
    %706 = vmatprep.subr.mxu0 0.0
    %707 = vmatpush1.msra.mxu0 0.0
    %708 = vmatprep.subr.mxu0 0.0
    %709 = vmatpush1.msra.mxu0 0.0
    %710 = vmatprep.subr.mxu0 0.0
    %711 = vmatpush1.msra.mxu0 0.0
    %712 = vmatprep.subr.mxu0 0.0
    %713 = vmatpush1.msra.mxu0 0.0
    %714 = vmatprep.subr.mxu0 0.0
    %715 = vmatpush1.msra.mxu0 0.0
    %716 = vmatprep.subr.mxu0 0.0
    %717 = vmatpush1.msra.mxu0 0.0
    %718 = vmatprep.subr.mxu0 0.0
    %719 = vmatpush1.msra.mxu0 0.0
    %720 = vmatprep.subr.mxu0 0.0
    %721 = vmatpush1.msra.mxu0 0.0
    %722 = vmatprep.subr.mxu0 0.0
    %723 = vmatpush1.msra.mxu0 0.0
    %724 = vmatprep.subr.mxu0 0.0
    %725 = vmatpush1.msra.mxu0 0.0
    %726 = vmatprep.subr.mxu0 0.0
    %727 = vmatpush1.msra.mxu0 0.0
    %728 = vmatprep.subr.mxu0 0.0
    %729 = vmatpush1.msra.mxu0 0.0
    %730 = vmatprep.subr.mxu0 0.0
    %731 = vmatpush1.msra.mxu0 0.0
    %732 = vmatprep.subr.mxu0 0.0
    %733 = vmatpush1.msra.mxu0 0.0
    %734 = vmatprep.subr.mxu0 0.0
    %735 = vmatpush1.msra.mxu0 0.0
    %736 = vmatprep.subr.mxu0 0.0
    %737 = vmatpush1.msra.mxu0 0.0
    %738 = vmatprep.subr.mxu0 0.0
    %739 = vmatpush1.msra.mxu0 0.0
    %740 = vmatprep.subr.mxu0 0.0
    %741 = vmatpush1.msra.mxu0 0.0
    %742 = vmatprep.subr.mxu0 0.0
    %743 = vmatpush1.msra.mxu0 0.0
    %744 = vmatprep.subr.mxu0 0.0
    %745 = vmatpush1.msra.mxu0 0.0
    %746 = vmatprep.subr.mxu0 0.0
    %747 = vmatpush1.msra.mxu0 0.0
    %748 = vmatprep.subr.mxu0 0.0
    %749 = vmatpush1.msra.mxu0 0.0
    %750 = vmatprep.subr.mxu0 0.0
    %751 = vmatpush1.msra.mxu0 0.0
    %752 = vmatprep.subr.mxu0 0.0
    %753 = vmatpush1.msra.mxu0 0.0
    %754 = vmatprep.subr.mxu0 0.0
    %755 = vmatpush1.msra.mxu0 0.0
    %756 = vmatprep.subr.mxu0 0.0
    %757 = vmatpush1.msra.mxu0 0.0
    %758 = vmatprep.subr.mxu0 0.0
    %759 = vmatpush1.msra.mxu0 0.0
    %760 = vmatprep.subr.mxu0 0.0
    %761 = vmatpush1.msra.mxu0 0.0
    %762 = vmatprep.subr.mxu0 0.0
    %763 = vmatpush1.msra.mxu0 0.0
    %764 = vmatprep.subr.mxu0 0.0
    %765 = vmatpush1.msra.mxu0 0.0
    %766 = vmatprep.mubr.f32.mxu0 0.0
    %767 = vmatmul.mubr.f32.gmra.mrb[0].mxu0 %v700
    %v768 = vpop.f32.mrb[0].mxu0
    %v769 = vadd.f32 0.0, %v768
    %v770 = vpop.f32.mrb[0].mxu0
    %771 = vdwg.mxu0
    %774 = vrot.lane.b32.xlu0 %v693, 16
    %v775 = vpop.permute.xlu0 %774
    %776 = vrot.lane.b32.xlu0 %v769, 16
    %v777 = vpop.permute.xlu0 %776
    %vm780 = vcmask 261248
    %781 = vst.msk [vmem:[#allocation2] sm:$0xff] %vm780, %v775
    %782 = vst.msk [vmem:[#allocation2 + $0x8] sm:$0xff] %vm780, %v777
    // Predicated region
    $region14: #{my_msa.1} parent=1 // pred_check
      _
    $region15: #{my_msa.1} parent=1 // pred_check_branch
      %784 = sbr.rel (0) target = $region17
    $region16: #{my_msa.1} parent=1 // pred_region
      %s786 = ssub.s32 256, 256
      %787 = vsyncadd [#allocation3], %s786
      %s788 = sshll.u32 [#allocation2], 4
      %s789 = int_to_ptr.vmem [resolvable:$true] %s788
      %794 = dma.vmem_to_hbm [thread:$0]  %s789, 256, %s3, [#allocation3], 128, 128, 8
    $region17: #{my_msa.1} parent=1 // pred_fallthru
      _
    // Predicated region
    $region18: #{my_msa.1} parent=1 // pred_check
      _
    $region19: #{my_msa.1} parent=1 // pred_check_branch
      %796 = sbr.rel (0) target = $region21
    $region20: #{my_msa.1} parent=1 // pred_region
      %797 = dma.done [#allocation3], 256
    $region21: #{my_msa.1} parent=1 // pred_fallthru
      _
    %798 = vsyncpa [#allocation3], 1

</llo_original>
